<compile_context>
chip_gen: v5e
topology: v5e:2x2
jax: 0.10.0
libtpu: 0.0.40
codegen_flags: <defaults>
</compile_context>

<pallas_src>
import functools

import jax
import jax.numpy as jnp
from jax.experimental import pallas as pl
from jax.experimental.pallas import tpu as pltpu

HIDDEN_LAYER_SIZES = [128, 128, 64, 64]

_LANE = 128
_SUBTILE = 1024                  # 8 sublane-rows of the lane-dense (., 128) output slab
_DEFAULT_TILE_B = 8192           # max rows per grid step (sweep 2048 / 4096 / 8192)
_VMEM_LIMIT_BYTES = 48 * 1024 * 1024


def _round_up(x, m):
    return ((x + m - 1) // m) * m


def _init_params(key, num_features, hidden_layer_sizes):
    """Deterministic PyTorch-style (uniform +-1/sqrt(fan_in)) Linear init."""
    sizes = [num_features] + list(hidden_layer_sizes) + [1]
    params = []
    for i in range(len(sizes) - 1):
        fan_in, fan_out = sizes[i], sizes[i + 1]
        key, kw, kb = jax.random.split(key, 3)
        bound = 1.0 / jnp.sqrt(jnp.float32(fan_in))
        w = jax.random.uniform(kw, (fan_in, fan_out), jnp.float32, -bound, bound)
        b = jax.random.uniform(kb, (1, fan_out), jnp.float32, -bound, bound)
        params.append((w, b))
    return params


def prepare_params(params, normalization_const=None):
    """One-time host-side prep:
      * fold 1/normalization_const into W0 ((x/c) @ W0 == x @ (W0/c)),
      * zero-pad hidden widths to multiples of 128 lanes (mathematically exact),
      * cast hidden weights to bf16 for the MXU (biases stay f32),
      * pack all hidden biases into one (n_hidden, max_width) f32 operand,
      * store the final 1-wide layer as a lane-major (1, H) f32 row plus a
        (1, 1) f32 scalar bias that lives in SMEM."""
    ws = [w for w, _ in params]
    bs = [b for _, b in params]
    if normalization_const is not None:
        ws[0] = ws[0] / jnp.float32(normalization_const)
    n_hidden = len(params) - 1
    for i in range(n_hidden):
        out = ws[i].shape[1]
        out_p = _round_up(out, _LANE)
        if out_p != out:  # zero output cols here + zero input rows of next layer
            ws[i] = jnp.pad(ws[i], ((0, 0), (0, out_p - out)))
            bs[i] = jnp.pad(bs[i], ((0, 0), (0, out_p - out)))
            ws[i + 1] = jnp.pad(ws[i + 1], ((0, out_p - out), (0, 0)))
    w_hidden = tuple(ws[i].astype(jnp.bfloat16) for i in range(n_hidden))
    max_w = max(int(w.shape[1]) for w in w_hidden)
    b_pack = jnp.concatenate(
        [jnp.pad(bs[i], ((0, 0), (0, max_w - bs[i].shape[1])))
         for i in range(n_hidden)], axis=0).astype(jnp.float32)   # (n_hidden, max_w)
    w_last = ws[-1].T.astype(jnp.float32)                          # (1, H_last) row
    b_last = bs[-1].reshape(1, 1).astype(jnp.float32)              # (1, 1) -> SMEM
    return (w_hidden, b_pack, w_last, b_last)


def _mlp_kernel(x_ref, *refs, n_hidden):
    o_ref = refs[-1]
    b_last_ref = refs[-2]        # (1, 1) f32 in SMEM
    w_last_ref = refs[-3]        # (1, H) f32 in VMEM
    b_pack_ref = refs[-4]        # (n_hidden, max_w) f32 in VMEM
    w_refs = refs[:n_hidden]     # bf16 hidden weights, VMEM-resident

    # Hidden layers: bf16 MXU matmuls with f32 accumulation.  Bias + ReLU run
    # in f32 (accurate on all chips, incl. v5e's f32-only VALU); the bf16 cast
    # is the last elementwise op so only a bf16 activation is materialized
    # between layers.
    h = x_ref[...].astype(jnp.bfloat16)
    for li in range(n_hidden):
        w_ref = w_refs[li]
        out_w = w_ref.shape[1]
        acc = jnp.dot(h, w_ref[...], preferred_element_type=jnp.float32)
        h = jnp.maximum(acc + b_pack_ref[li, :out_w], 0.0).astype(jnp.bfloat16)

    # Final 1-wide layer: VPU multiply + XLU lane reduction (no N=1 MXU pass),
    # stored as a lane-dense (tile_b//128, 128) slab (unmasked vst).
    y = jnp.sum(h * w_last_ref[...], axis=1) + b_last_ref[0, 0]    # (tile_b,) f32
    o_ref[...] = jnp.abs(y).reshape(o_ref.shape)


def default_val_net_forward(state, prepared_params):
    """Pallas implementation of DefaultValNet.forward.

    state: [B, num_features] float32; prepared_params: output of prepare_params().
    Returns [B] float32 (== torch.abs(torch.flatten(net(state / c)))).
    """
    w_hidden, b_pack, w_last, b_last = prepared_params
    batch, nf = state.shape
    n_hidden = len(w_hidden)

    # Tile selection: no batch padding (partial last block), tile_b a multiple
    # of 1024 for large batches (8-sublane output granularity), and >=2 grid
    # steps when the batch allows it so both v7x TensorCores get work.
    if batch <= _SUBTILE:
        tile_b = _round_up(batch, _LANE)
    else:
        tile_b = min(_DEFAULT_TILE_B, _round_up(pl.cdiv(batch, 2), _SUBTILE))
    grid = (pl.cdiv(batch, tile_b),)
    rows_out = pl.cdiv(batch, _LANE)

    operands = [state, *w_hidden, b_pack, w_last, b_last]
    in_specs = [pl.BlockSpec((tile_b, nf), lambda i: (i, 0))]
    # Weights/biases: full-array blocks with constant index maps -> DMA'd once,
    # VMEM-resident across grid steps.
    for w in w_hidden:
        in_specs.append(pl.BlockSpec(tuple(w.shape), lambda i: (0, 0)))
    in_specs.append(pl.BlockSpec(tuple(b_pack.shape), lambda i: (0, 0)))
    in_specs.append(pl.BlockSpec(tuple(w_last.shape), lambda i: (0, 0)))
    in_specs.append(pl.BlockSpec(memory_space=pltpu.MemorySpace.SMEM))

    out_shape = jax.ShapeDtypeStruct((rows_out, _LANE), jnp.float32)
    out_specs = pl.BlockSpec((tile_b // _LANE, _LANE), lambda i: (i, 0))

    flops = sum(2 * batch * int(w.shape[0]) * int(w.shape[1]) for w in w_hidden)
    flops += 2 * batch * int(w_last.shape[1])
    param_bytes = sum(int(a.size) * a.dtype.itemsize
                      for a in (*w_hidden, b_pack, w_last, b_last))
    cost = pl.CostEstimate(
        flops=int(flops), transcendentals=0,
        bytes_accessed=int(batch * nf * 4 + rows_out * _LANE * 4 + param_bytes))

    out = pl.pallas_call(
        functools.partial(_mlp_kernel, n_hidden=n_hidden),
        out_shape=out_shape,
        grid=grid,
        in_specs=in_specs,
        out_specs=out_specs,
        compiler_params=pltpu.CompilerParams(
            dimension_semantics=("parallel",),
            vmem_limit_bytes=_VMEM_LIMIT_BYTES),
        cost_estimate=cost,
    )(*operands)
    return out.reshape(-1)[:batch]


if __name__ == "__main__":
    num_features = 16
    batch = 8
    normalization_const = 10.0

    key = jax.random.PRNGKey(0)
    key_params, key_x = jax.random.split(key)
    raw_params = _init_params(key_params, num_features, HIDDEN_LAYER_SIZES)
    params = prepare_params(raw_params, normalization_const)
    x = jax.random.normal(key_x, (batch, num_features), jnp.float32)

    y = default_val_net_forward(x, params)
    jax.block_until_ready(y)

    # Pure-JAX f32 reference (kernel uses bf16 MXU operands -> loose tolerance).
    def ref_forward(state):
        h = state / normalization_const
        for w, b in raw_params[:-1]:
            h = jnp.maximum(h @ w + b, 0.0)
        w, b = raw_params[-1]
        return jnp.abs((h @ w + b).reshape(-1))

    y_ref = ref_forward(x)
    assert y.shape == (batch,)
    assert bool(jnp.all(y >= 0.0))          # abs() output is non-negative
    assert bool(jnp.allclose(y, y_ref, rtol=3e-2, atol=3e-2))
    print("KERNEL_OK")
</pallas_src>

<mosaic_0001>
module attributes {stable_mosaic.version = 11 : i64} {
  func.func @_mlp_kernel(%arg0: i32, %arg1: memref<128x16xf32, #tpu.memory_space<vmem>>, %arg2: memref<16x128xbf16, #tpu.memory_space<vmem>>, %arg3: memref<128x128xbf16, #tpu.memory_space<vmem>>, %arg4: memref<128x128xbf16, #tpu.memory_space<vmem>>, %arg5: memref<128x128xbf16, #tpu.memory_space<vmem>>, %arg6: memref<4x128xf32, #tpu.memory_space<vmem>>, %arg7: memref<1x128xf32, #tpu.memory_space<vmem>>, %arg8: memref<1x1xf32, #tpu.memory_space<smem>>, %arg9: memref<1x128xf32, #tpu.memory_space<vmem>>) attributes {dimension_semantics = [#tpu.dimension_semantics<parallel>], iteration_bounds = array<i64: 1>, scalar_prefetch = 0 : i64, scratch_operands = 0 : i64, tpu.core_type = #tpu.core_type<tc>, window_params = [{transform_indices = @transform_0, window_bounds = array<i64: 128, 16>}, {pipeline_mode = #tpu.pipeline_mode<synchronous>, transform_indices = @transform_1, window_bounds = array<i64: 16, 128>}, {pipeline_mode = #tpu.pipeline_mode<synchronous>, transform_indices = @transform_2, window_bounds = array<i64: 128, 128>}, {pipeline_mode = #tpu.pipeline_mode<synchronous>, transform_indices = @transform_3, window_bounds = array<i64: 128, 128>}, {pipeline_mode = #tpu.pipeline_mode<synchronous>, transform_indices = @transform_4, window_bounds = array<i64: 128, 128>}, {pipeline_mode = #tpu.pipeline_mode<synchronous>, transform_indices = @transform_5, window_bounds = array<i64: 4, 128>}, {pipeline_mode = #tpu.pipeline_mode<synchronous>, transform_indices = @transform_6, window_bounds = array<i64: 1, 128>}, {transform_indices = @transform_7, window_bounds = array<i64: 1, 1>}, {transform_indices = @transform_8, window_bounds = array<i64: 1, 128>}]} {
    %c0 = arith.constant 0 : index
    %c0_0 = arith.constant 0 : index
    %0 = vector.load %arg1[%c0, %c0_0] : memref<128x16xf32, #tpu.memory_space<vmem>>, vector<128x16xf32>
    %1 = arith.truncf %0 : vector<128x16xf32> to vector<128x16xbf16>
    %c0_1 = arith.constant 0 : index
    %c0_2 = arith.constant 0 : index
    %2 = vector.load %arg2[%c0_1, %c0_2] : memref<16x128xbf16, #tpu.memory_space<vmem>>, vector<16x128xbf16>
    %cst = arith.constant dense<0.000000e+00> : vector<128x128xf32>
    %3 = tpu.matmul %1, %2, %cst {dimension_numbers = #tpu.dot_dimension_numbers<[1], [0], [0], [1], [0, 0, 1, 1], [], []>} : vector<128x16xbf16>, vector<16x128xbf16>, vector<128x128xf32> -> vector<128x128xf32>
    %c0_3 = arith.constant 0 : index
    %c0_4 = arith.constant 0 : index
    %4 = vector.load %arg6[%c0_3, %c0_4] : memref<4x128xf32, #tpu.memory_space<vmem>>, vector<1x128xf32>
    %5 = vector.shape_cast %4 : vector<1x128xf32> to vector<128xf32>
    %6 = vector.shape_cast %5 : vector<128xf32> to vector<1x128xf32>
    %7 = vector.broadcast %6 : vector<1x128xf32> to vector<128x128xf32>
    %8 = arith.addf %3, %7 : vector<128x128xf32>
    %cst_5 = arith.constant 0.000000e+00 : f32
    %9 = vector.broadcast %cst_5 : f32 to vector<128x128xf32>
    %10 = arith.maximumf %8, %9 : vector<128x128xf32>
    %11 = arith.truncf %10 : vector<128x128xf32> to vector<128x128xbf16>
    %c0_6 = arith.constant 0 : index
    %c0_7 = arith.constant 0 : index
    %12 = vector.load %arg3[%c0_6, %c0_7] : memref<128x128xbf16, #tpu.memory_space<vmem>>, vector<128x128xbf16>
    %cst_8 = arith.constant dense<0.000000e+00> : vector<128x128xf32>
    %13 = tpu.matmul %11, %12, %cst_8 {dimension_numbers = #tpu.dot_dimension_numbers<[1], [0], [0], [1], [0, 0, 1, 1], [], []>} : vector<128x128xbf16>, vector<128x128xbf16>, vector<128x128xf32> -> vector<128x128xf32>
    %c1 = arith.constant 1 : index
    %c0_9 = arith.constant 0 : index
    %14 = vector.load %arg6[%c1, %c0_9] : memref<4x128xf32, #tpu.memory_space<vmem>>, vector<1x128xf32>
    %15 = vector.shape_cast %14 : vector<1x128xf32> to vector<128xf32>
    %16 = vector.shape_cast %15 : vector<128xf32> to vector<1x128xf32>
    %17 = vector.broadcast %16 : vector<1x128xf32> to vector<128x128xf32>
    %18 = arith.addf %13, %17 : vector<128x128xf32>
    %cst_10 = arith.constant 0.000000e+00 : f32
    %19 = vector.broadcast %cst_10 : f32 to vector<128x128xf32>
    %20 = arith.maximumf %18, %19 : vector<128x128xf32>
    %21 = arith.truncf %20 : vector<128x128xf32> to vector<128x128xbf16>
    %c0_11 = arith.constant 0 : index
    %c0_12 = arith.constant 0 : index
    %22 = vector.load %arg4[%c0_11, %c0_12] : memref<128x128xbf16, #tpu.memory_space<vmem>>, vector<128x128xbf16>
    %cst_13 = arith.constant dense<0.000000e+00> : vector<128x128xf32>
    %23 = tpu.matmul %21, %22, %cst_13 {dimension_numbers = #tpu.dot_dimension_numbers<[1], [0], [0], [1], [0, 0, 1, 1], [], []>} : vector<128x128xbf16>, vector<128x128xbf16>, vector<128x128xf32> -> vector<128x128xf32>
    %c2 = arith.constant 2 : index
    %c0_14 = arith.constant 0 : index
    %24 = vector.load %arg6[%c2, %c0_14] : memref<4x128xf32, #tpu.memory_space<vmem>>, vector<1x128xf32>
    %25 = vector.shape_cast %24 : vector<1x128xf32> to vector<128xf32>
    %26 = vector.shape_cast %25 : vector<128xf32> to vector<1x128xf32>
    %27 = vector.broadcast %26 : vector<1x128xf32> to vector<128x128xf32>
    %28 = arith.addf %23, %27 : vector<128x128xf32>
    %cst_15 = arith.constant 0.000000e+00 : f32
    %29 = vector.broadcast %cst_15 : f32 to vector<128x128xf32>
    %30 = arith.maximumf %28, %29 : vector<128x128xf32>
    %31 = arith.truncf %30 : vector<128x128xf32> to vector<128x128xbf16>
    %c0_16 = arith.constant 0 : index
    %c0_17 = arith.constant 0 : index
    %32 = vector.load %arg5[%c0_16, %c0_17] : memref<128x128xbf16, #tpu.memory_space<vmem>>, vector<128x128xbf16>
    %cst_18 = arith.constant dense<0.000000e+00> : vector<128x128xf32>
    %33 = tpu.matmul %31, %32, %cst_18 {dimension_numbers = #tpu.dot_dimension_numbers<[1], [0], [0], [1], [0, 0, 1, 1], [], []>} : vector<128x128xbf16>, vector<128x128xbf16>, vector<128x128xf32> -> vector<128x128xf32>
    %c3 = arith.constant 3 : index
    %c0_19 = arith.constant 0 : index
    %34 = vector.load %arg6[%c3, %c0_19] : memref<4x128xf32, #tpu.memory_space<vmem>>, vector<1x128xf32>
    %35 = vector.shape_cast %34 : vector<1x128xf32> to vector<128xf32>
    %36 = vector.shape_cast %35 : vector<128xf32> to vector<1x128xf32>
    %37 = vector.broadcast %36 : vector<1x128xf32> to vector<128x128xf32>
    %38 = arith.addf %33, %37 : vector<128x128xf32>
    %cst_20 = arith.constant 0.000000e+00 : f32
    %39 = vector.broadcast %cst_20 : f32 to vector<128x128xf32>
    %40 = arith.maximumf %38, %39 : vector<128x128xf32>
    %41 = arith.truncf %40 : vector<128x128xf32> to vector<128x128xbf16>
    %c0_21 = arith.constant 0 : index
    %c0_22 = arith.constant 0 : index
    %42 = vector.load %arg7[%c0_21, %c0_22] : memref<1x128xf32, #tpu.memory_space<vmem>>, vector<1x128xf32>
    %43 = arith.extf %41 : vector<128x128xbf16> to vector<128x128xf32>
    %44 = vector.broadcast %42 : vector<1x128xf32> to vector<128x128xf32>
    %45 = arith.mulf %43, %44 : vector<128x128xf32>
    %cst_23 = arith.constant dense<0.000000e+00> : vector<128xf32>
    %46 = vector.multi_reduction <add>, %45, %cst_23 [1] : vector<128x128xf32> to vector<128xf32>
    %c0_24 = arith.constant 0 : index
    %c0_25 = arith.constant 0 : index
    %47 = memref.load %arg8[%c0_24, %c0_25] : memref<1x1xf32, #tpu.memory_space<smem>>
    %48 = vector.broadcast %47 : f32 to vector<128xf32>
    %49 = arith.addf %46, %48 : vector<128xf32>
    %50 = math.absf %49 : vector<128xf32>
    %51 = vector.shape_cast %50 : vector<128xf32> to vector<1x128xf32>
    %c0_26 = arith.constant 0 : index
    %c0_27 = arith.constant 0 : index
    %52 = vector.load %arg9[%c0_26, %c0_27] : memref<1x128xf32, #tpu.memory_space<vmem>>, vector<1x128xf32>
    tpu.vector_store %arg9[%c0_26, %c0_27], %51 {strides = array<i32>} : memref<1x128xf32, #tpu.memory_space<vmem>>, vector<1x128xf32>,
    return
  }
  func.func @transform_0(%arg0: i32) -> (i32, i32) {
    %c0_i32 = arith.constant 0 : i32
    %c0_i32_0 = arith.constant 0 : i32
    return %arg0, %c0_i32 : i32, i32
  }
  func.func @transform_1(%arg0: i32) -> (i32, i32) {
    %c0_i32 = arith.constant 0 : i32
    %c0_i32_0 = arith.constant 0 : i32
    %c0_i32_1 = arith.constant 0 : i32
    return %c0_i32, %c0_i32_0 : i32, i32
  }
  func.func @transform_2(%arg0: i32) -> (i32, i32) {
    %c0_i32 = arith.constant 0 : i32
    %c0_i32_0 = arith.constant 0 : i32
    %c0_i32_1 = arith.constant 0 : i32
    return %c0_i32, %c0_i32_0 : i32, i32
  }
  func.func @transform_3(%arg0: i32) -> (i32, i32) {
    %c0_i32 = arith.constant 0 : i32
    %c0_i32_0 = arith.constant 0 : i32
    %c0_i32_1 = arith.constant 0 : i32
    return %c0_i32, %c0_i32_0 : i32, i32
  }
  func.func @transform_4(%arg0: i32) -> (i32, i32) {
    %c0_i32 = arith.constant 0 : i32
    %c0_i32_0 = arith.constant 0 : i32
    %c0_i32_1 = arith.constant 0 : i32
    return %c0_i32, %c0_i32_0 : i32, i32
  }
  func.func @transform_5(%arg0: i32) -> (i32, i32) {
    %c0_i32 = arith.constant 0 : i32
    %c0_i32_0 = arith.constant 0 : i32
    %c0_i32_1 = arith.constant 0 : i32
    return %c0_i32, %c0_i32_0 : i32, i32
  }
  func.func @transform_6(%arg0: i32) -> (i32, i32) {
    %c0_i32 = arith.constant 0 : i32
    %c0_i32_0 = arith.constant 0 : i32
    %c0_i32_1 = arith.constant 0 : i32
    return %c0_i32, %c0_i32_0 : i32, i32
  }
  func.func @transform_7(%arg0: i32) -> (i32, i32) {
    %c0_i32 = arith.constant 0 : i32
    %c0_i32_0 = arith.constant 0 : i32
    %c0_i32_1 = arith.constant 0 : i32
    return %c0_i32, %c0_i32_0 : i32, i32
  }
  func.func @transform_8(%arg0: i32) -> (i32, i32) {
    %c0_i32 = arith.constant 0 : i32
    %c0_i32_0 = arith.constant 0 : i32
    return %arg0, %c0_i32 : i32, i32
  }
}

</mosaic_0001>

<llo_original>
// kernel: tpu_custom_call.1
$region0: #{tpu_custom_call.1}
  #allocation0 [shape = 'u32[]', space=smem, size = 0x4, offset = 0x4, fixed_abs, tag = 'smem constant byte address 0x4 - core index']
  #allocation1 [shape = 'u32[72,128]{1,0:T(1,128)}', space=vmem, size = 0x9000, scoped, tag = 'internal scratch']
  #allocation2 [shape = 'f32[1,1]{1,0:T(1,128)S(6)}', space=smem, size = 0x200, scoped, tag = 'scoped memory for tpu_custom_call.1']
  %s0 = inlined_call_operand.hbm [shape: f32[8,16], index: 0, kind: input, shape index: {}]
  %s1 = inlined_call_operand.hbm [shape: bf16[16,128], index: 1, kind: input, shape index: {}]
  %s2 = inlined_call_operand.hbm [shape: bf16[128,128], index: 2, kind: input, shape index: {}]
  %s3 = inlined_call_operand.hbm [shape: bf16[128,128], index: 3, kind: input, shape index: {}]
  %s4 = inlined_call_operand.hbm [shape: bf16[128,128], index: 4, kind: input, shape index: {}]
  %s5 = inlined_call_operand.vmem [shape: f32[4,128], index: 5, kind: input, shape index: {}]
  %s6 = inlined_call_operand.vmem [shape: f32[1,128], index: 6, kind: input, shape index: {}]
  %s7 = inlined_call_operand.<no memory space> [shape: f32[1,1], index: 7, kind: input, shape index: {}]
  %s8 = inlined_call_operand.hbm [shape: f32[1,128], index: 8, kind: output, shape index: {}]
  %s9 = sld [smem:[#allocation0]]
  $region62: #{tpu_custom_call.1} parent=0
    _
  %s11 = ssub.s32 1, %s9
  %s12 = scalar_select 0, %s11, %s9
  %13 = sst [smem:[#allocation2]] %s7
  $region1: #{tpu_custom_call.1} parent=0
    #allocation3 [shape = 'u8[65536]{0}', space=vmem, size = 0x10000, scoped, tag = 'input window, operand 0, single buffered']
    #allocation4 [shape = 's32[1]{0}', space=sflag, size = 0x4, scoped, tag = 'scoped memory for tpu_custom_call.1']
    #allocation5 [shape = 's32[1]{0}', space=sflag, size = 0x4, scoped, tag = 'scoped memory for tpu_custom_call.1']
    #allocation6 [shape = 'u8[4096]{0}', space=vmem, size = 0x1000, scoped, tag = 'input window, operand 1, single buffered']
    #allocation7 [shape = 's32[1]{0}', space=sflag, size = 0x4, scoped, tag = 'scoped memory for tpu_custom_call.1']
    #allocation8 [shape = 'u8[32768]{0}', space=vmem, size = 0x8000, scoped, tag = 'input window, operand 2, single buffered']
    #allocation9 [shape = 'u8[32768]{0}', space=vmem, size = 0x8000, scoped, tag = 'input window, operand 3, single buffered']
    #allocation10 [shape = 's32[1]{0}', space=sflag, size = 0x4, scoped, tag = 'scoped memory for tpu_custom_call.1']
    #allocation11 [shape = 'u8[32768]{0}', space=vmem, size = 0x8000, scoped, tag = 'input window, operand 4, single buffered']
    #allocation12 [shape = 'u8[512]{0}', space=vmem, size = 0x400, scoped, tag = 'output window, operand 0, single buffered']
    %14 = vsyncpa [#allocation4], 0
    %15 = vsyncpa [#allocation7], 0
    %16 = vsyncpa [#allocation10], 0
    %17 = vsyncpa [#allocation5], 0
    // Predicated region
    $region2: #{tpu_custom_call.1} parent=1 // pred_check
      _
    $region3: #{tpu_custom_call.1} parent=1 // pred_check_branch
      %19 = sbr.rel (0) target = $region5
    $region4: #{tpu_custom_call.1} parent=1 // pred_region
      %21 = vsyncadd [#allocation4], 1920
      %s22 = sshll.u32 %s0, 4
      %s23 = int_to_ptr.hbm [resolvable:$true] %s22
      %s24 = sshll.u32 [#allocation3], 4
      %s25 = int_to_ptr.vmem [resolvable:$true] %s24
      %30 = dma.hbm_to_vmem [thread:$0]  %s23, 128, %s25, [#allocation4], 128, 128, 8
    $region5: #{tpu_custom_call.1} parent=1 // pred_fallthru
      _
    // Predicated region
    $region6: #{tpu_custom_call.1} parent=1 // pred_check
      _
    $region7: #{tpu_custom_call.1} parent=1 // pred_check_branch
      %32 = sbr.rel (0) target = $region9
    $region8: #{tpu_custom_call.1} parent=1 // pred_region
      %34 = vsyncadd [#allocation7], 0
      %s35 = sshll.u32 %s1, 4
      %s36 = int_to_ptr.hbm [resolvable:$true] %s35
      %s37 = sshll.u32 [#allocation6], 4
      %s38 = int_to_ptr.vmem [resolvable:$true] %s37
      %43 = dma.hbm_to_vmem [thread:$0]  %s36, 128, %s38, [#allocation7], 64, 64, 4
    $region9: #{tpu_custom_call.1} parent=1 // pred_fallthru
      _
    // Predicated region
    $region10: #{tpu_custom_call.1} parent=1 // pred_check
      _
    $region11: #{tpu_custom_call.1} parent=1 // pred_check_branch
      %45 = sbr.rel (0) target = $region13
    $region12: #{tpu_custom_call.1} parent=1 // pred_region
      %47 = vsyncadd [#allocation7], 0
      %s48 = sshll.u32 %s2, 4
      %s49 = int_to_ptr.hbm [resolvable:$true] %s48
      %s50 = sshll.u32 [#allocation8], 4
      %s51 = int_to_ptr.vmem [resolvable:$true] %s50
      %56 = dma.hbm_to_vmem [thread:$0]  %s49, 1024, %s51, [#allocation7], 64, 64, 4
    $region13: #{tpu_custom_call.1} parent=1 // pred_fallthru
      _
    // Predicated region
    $region14: #{tpu_custom_call.1} parent=1 // pred_check
      _
    $region15: #{tpu_custom_call.1} parent=1 // pred_check_branch
      %58 = sbr.rel (0) target = $region17
    $region16: #{tpu_custom_call.1} parent=1 // pred_region
      %60 = vsyncadd [#allocation10], 0
      %s61 = sshll.u32 %s3, 4
      %s62 = int_to_ptr.hbm [resolvable:$true] %s61
      %s63 = sshll.u32 [#allocation9], 4
      %s64 = int_to_ptr.vmem [resolvable:$true] %s63
      %69 = dma.hbm_to_vmem [thread:$0]  %s62, 1024, %s64, [#allocation10], 64, 64, 4
    $region17: #{tpu_custom_call.1} parent=1 // pred_fallthru
      _
    // Predicated region
    $region18: #{tpu_custom_call.1} parent=1 // pred_check
      _
    $region19: #{tpu_custom_call.1} parent=1 // pred_check_branch
      %71 = sbr.rel (0) target = $region21
    $region20: #{tpu_custom_call.1} parent=1 // pred_region
      %73 = vsyncadd [#allocation10], 0
      %s74 = sshll.u32 %s4, 4
      %s75 = int_to_ptr.hbm [resolvable:$true] %s74
      %s76 = sshll.u32 [#allocation11], 4
      %s77 = int_to_ptr.vmem [resolvable:$true] %s76
      %82 = dma.hbm_to_vmem [thread:$0]  %s75, 1024, %s77, [#allocation10], 64, 64, 4
    $region21: #{tpu_custom_call.1} parent=1 // pred_fallthru
      _
    // Predicated region
    $region22: #{tpu_custom_call.1} parent=1 // pred_check
      _
    $region23: #{tpu_custom_call.1} parent=1 // pred_check_branch
      %84 = sbr.rel (0) target = $region25
    $region24: #{tpu_custom_call.1} parent=1 // pred_region
      _
    $region25: #{tpu_custom_call.1} parent=1 // pred_fallthru
      _
    // Predicated region
    $region26: #{tpu_custom_call.1} parent=1 // pred_check
      _
    $region27: #{tpu_custom_call.1} parent=1 // pred_check_branch
      %86 = sbr.rel (0) target = $region29
    $region28: #{tpu_custom_call.1} parent=1 // pred_region
      _
    $region29: #{tpu_custom_call.1} parent=1 // pred_fallthru
      _
    // Predicated region
    $region30: #{tpu_custom_call.1} parent=1 // pred_check
      _
    $region31: #{tpu_custom_call.1} parent=1 // pred_check_branch
      %88 = sbr.rel (0) target = $region33
    $region32: #{tpu_custom_call.1} parent=1 // pred_region
      _
    $region33: #{tpu_custom_call.1} parent=1 // pred_fallthru
      _
    // Predicated region
    $region34: #{tpu_custom_call.1} parent=1 // pred_check
      _
    $region35: #{tpu_custom_call.1} parent=1 // pred_check_branch
      %90 = sbr.rel (0) target = $region37
    $region36: #{tpu_custom_call.1} parent=1 // pred_region
      %92 = dma.done [#allocation4], 2048
    $region37: #{tpu_custom_call.1} parent=1 // pred_fallthru
      _
    // Predicated region
    $region38: #{tpu_custom_call.1} parent=1 // pred_check
      _
    $region39: #{tpu_custom_call.1} parent=1 // pred_check_branch
      %94 = sbr.rel (0) target = $region41
    $region40: #{tpu_custom_call.1} parent=1 // pred_region
      %96 = dma.done [#allocation7], 128
    $region41: #{tpu_custom_call.1} parent=1 // pred_fallthru
      _
    // Predicated region
    $region42: #{tpu_custom_call.1} parent=1 // pred_check
      _
    $region43: #{tpu_custom_call.1} parent=1 // pred_check_branch
      %98 = sbr.rel (0) target = $region45
    $region44: #{tpu_custom_call.1} parent=1 // pred_region
      %100 = dma.done [#allocation7], 1024
    $region45: #{tpu_custom_call.1} parent=1 // pred_fallthru
      _
    // Predicated region
    $region46: #{tpu_custom_call.1} parent=1 // pred_check
      _
    $region47: #{tpu_custom_call.1} parent=1 // pred_check_branch
      %102 = sbr.rel (0) target = $region49
    $region48: #{tpu_custom_call.1} parent=1 // pred_region
      %104 = dma.done [#allocation10], 1024
    $region49: #{tpu_custom_call.1} parent=1 // pred_fallthru
      _
    // Predicated region
    $region50: #{tpu_custom_call.1} parent=1 // pred_check
      _
    $region51: #{tpu_custom_call.1} parent=1 // pred_check_branch
      %106 = sbr.rel (0) target = $region53
    $region52: #{tpu_custom_call.1} parent=1 // pred_region
      %108 = dma.done [#allocation10], 1024
    $region53: #{tpu_custom_call.1} parent=1 // pred_fallthru
      _
    %v110 = vld [vmem:[#allocation3] sm:$0xff]
    %v111 = vld [vmem:[#allocation3 + $0x8] sm:$0xff]
    %v112 = vld [vmem:[#allocation3 + $0x10] sm:$0xff]
    %v113 = vld [vmem:[#allocation3 + $0x18] sm:$0xff]
    %v114 = vld [vmem:[#allocation3 + $0x20] sm:$0xff]
    %v115 = vld [vmem:[#allocation3 + $0x28] sm:$0xff]
    %v116 = vld [vmem:[#allocation3 + $0x30] sm:$0xff]
    %v117 = vld [vmem:[#allocation3 + $0x38] sm:$0xff]
    %v118 = vld [vmem:[#allocation3 + $0x40] sm:$0xff]
    %v119 = vld [vmem:[#allocation3 + $0x48] sm:$0xff]
    %v120 = vld [vmem:[#allocation3 + $0x50] sm:$0xff]
    %v121 = vld [vmem:[#allocation3 + $0x58] sm:$0xff]
    %v122 = vld [vmem:[#allocation3 + $0x60] sm:$0xff]
    %v123 = vld [vmem:[#allocation3 + $0x68] sm:$0xff]
    %v124 = vld [vmem:[#allocation3 + $0x70] sm:$0xff]
    %v125 = vld [vmem:[#allocation3 + $0x78] sm:$0xff]
    %v126 = vpack.c.bf16 %v111, %v110
    %v127 = vpack.c.bf16 %v113, %v112
    %v128 = vpack.c.bf16 %v115, %v114
    %v129 = vpack.c.bf16 %v117, %v116
    %v130 = vpack.c.bf16 %v119, %v118
    %v131 = vpack.c.bf16 %v121, %v120
    %v132 = vpack.c.bf16 %v123, %v122
    %v133 = vpack.c.bf16 %v125, %v124
    %v134 = vld [vmem:[#allocation6] sm:$0xf]
    %v135 = vld [vmem:[#allocation6 + $0x4] sm:$0xf]
    %v136 = vld [vmem:[%s5] sm:$0x1]
    %v137 = vperm.slane %v136, 0
    %v140 = vunpack.c.l.b16 %v134
    %v141 = vunpack.c.l.b16 %v135
    %v142 = vpack.c.b16 %v141, %v140
    %vm144 = vcmask 130048
    %v146 = vsel %vm144, %v126, 0
    %v149 = vsel %vm144, %v127, 0
    %v152 = vsel %vm144, %v128, 0
    %v155 = vsel %vm144, %v129, 0
    %v158 = vsel %vm144, %v130, 0
    %v161 = vsel %vm144, %v131, 0
    %v164 = vsel %vm144, %v132, 0
    %v167 = vsel %vm144, %v133, 0
    %169 = vmatpush.bf16.msra.mxu0 0
    %170 = vmatpush.bf16.msra.mxu0 0
    %171 = vmatpush.bf16.msra.mxu0 0
    %172 = vmatpush.bf16.msra.mxu0 0
    %173 = vmatpush.bf16.msra.mxu0 0
    %174 = vmatpush.bf16.msra.mxu0 0
    %175 = vmatpush.bf16.msra.mxu0 0
    %176 = vmatpush.bf16.msra.mxu0 %v142
    %177 = vmatmul.bf16.gmra.mxu0 %v146
    %v178 = vpop.f32.mrf.mxu0
    %v179 = vadd.f32 %v137, %v178
    %v180 = vpop.f32.mrf.mxu0
    %v181 = vadd.f32 %v137, %v180
    %182 = vmatmul.bf16.gmra.mxu0 %v149
    %v183 = vpop.f32.mrf.mxu0
    %v184 = vadd.f32 %v137, %v183
    %v185 = vpop.f32.mrf.mxu0
    %v186 = vadd.f32 %v137, %v185
    %187 = vmatmul.bf16.gmra.mxu0 %v152
    %v188 = vpop.f32.mrf.mxu0
    %v189 = vadd.f32 %v137, %v188
    %v190 = vpop.f32.mrf.mxu0
    %v191 = vadd.f32 %v137, %v190
    %192 = vmatmul.bf16.gmra.mxu0 %v155
    %v193 = vpop.f32.mrf.mxu0
    %v194 = vadd.f32 %v137, %v193
    %v195 = vpop.f32.mrf.mxu0
    %v196 = vadd.f32 %v137, %v195
    %197 = vmatmul.bf16.gmra.mxu0 %v158
    %v198 = vpop.f32.mrf.mxu0
    %v199 = vadd.f32 %v137, %v198
    %v200 = vpop.f32.mrf.mxu0
    %v201 = vadd.f32 %v137, %v200
    %202 = vmatmul.bf16.gmra.mxu0 %v161
    %v203 = vpop.f32.mrf.mxu0
    %v204 = vadd.f32 %v137, %v203
    %v205 = vpop.f32.mrf.mxu0
    %v206 = vadd.f32 %v137, %v205
    %207 = vmatmul.bf16.gmra.mxu0 %v164
    %v208 = vpop.f32.mrf.mxu0
    %v209 = vadd.f32 %v137, %v208
    %v210 = vpop.f32.mrf.mxu0
    %v211 = vadd.f32 %v137, %v210
    %212 = vmatmul.bf16.gmra.mxu0 %v167
    %v213 = vpop.f32.mrf.mxu0
    %v214 = vadd.f32 %v137, %v213
    %v215 = vpop.f32.mrf.mxu0
    %v216 = vadd.f32 %v137, %v215
    %217 = vdwg.mxu0
    %v218 = vmax.f32 %v179, 0.0
    %v219 = vmax.f32 %v181, 0.0
    %v220 = vmax.f32 %v184, 0.0
    %v221 = vmax.f32 %v186, 0.0
    %v222 = vmax.f32 %v189, 0.0
    %v223 = vmax.f32 %v191, 0.0
    %v224 = vmax.f32 %v194, 0.0
    %v225 = vmax.f32 %v196, 0.0
    %v226 = vmax.f32 %v199, 0.0
    %v227 = vmax.f32 %v201, 0.0
    %v228 = vmax.f32 %v204, 0.0
    %v229 = vmax.f32 %v206, 0.0
    %v230 = vmax.f32 %v209, 0.0
    %v231 = vmax.f32 %v211, 0.0
    %v232 = vmax.f32 %v214, 0.0
    %v233 = vmax.f32 %v216, 0.0
    %v234 = vpack.c.bf16 %v219, %v218
    %v235 = vpack.c.bf16 %v221, %v220
    %v236 = vpack.c.bf16 %v223, %v222
    %v237 = vpack.c.bf16 %v225, %v224
    %v238 = vpack.c.bf16 %v227, %v226
    %v239 = vpack.c.bf16 %v229, %v228
    %v240 = vpack.c.bf16 %v231, %v230
    %v241 = vpack.c.bf16 %v233, %v232
    %v242 = vld [vmem:[#allocation8] sm:$0xf]
    %v243 = vld [vmem:[#allocation8 + $0x4] sm:$0xf]
    %v244 = vld [vmem:[#allocation8 + $0x8] sm:$0xf]
    %v245 = vld [vmem:[#allocation8 + $0xc] sm:$0xf]
    %v246 = vld [vmem:[#allocation8 + $0x10] sm:$0xf]
    %v247 = vld [vmem:[#allocation8 + $0x14] sm:$0xf]
    %v248 = vld [vmem:[#allocation8 + $0x18] sm:$0xf]
    %v249 = vld [vmem:[#allocation8 + $0x1c] sm:$0xf]
    %v250 = vld [vmem:[#allocation8 + $0x20] sm:$0xf]
    %v251 = vld [vmem:[#allocation8 + $0x24] sm:$0xf]
    %v252 = vld [vmem:[#allocation8 + $0x28] sm:$0xf]
    %v253 = vld [vmem:[#allocation8 + $0x2c] sm:$0xf]
    %v254 = vld [vmem:[#allocation8 + $0x30] sm:$0xf]
    %v255 = vld [vmem:[#allocation8 + $0x34] sm:$0xf]
    %v256 = vld [vmem:[#allocation8 + $0x38] sm:$0xf]
    %v257 = vld [vmem:[#allocation8 + $0x3c] sm:$0xf]
    %v258 = vld [vmem:[%s5 + $0x1] sm:$0x1]
    %v259 = vperm.slane %v258, 0
    %v276 = vunpack.c.l.b16 %v242
    %v277 = vunpack.c.l.b16 %v243
    %v278 = vunpack.c.l.b16 %v244
    %v279 = vunpack.c.l.b16 %v245
    %v280 = vunpack.c.l.b16 %v246
    %v281 = vunpack.c.l.b16 %v247
    %v282 = vunpack.c.l.b16 %v248
    %v283 = vunpack.c.l.b16 %v249
    %v284 = vunpack.c.l.b16 %v250
    %v285 = vunpack.c.l.b16 %v251
    %v286 = vunpack.c.l.b16 %v252
    %v287 = vunpack.c.l.b16 %v253
    %v288 = vunpack.c.l.b16 %v254
    %v289 = vunpack.c.l.b16 %v255
    %v290 = vunpack.c.l.b16 %v256
    %v291 = vunpack.c.l.b16 %v257
    %v292 = vpack.c.b16 %v277, %v276
    %v293 = vpack.c.b16 %v279, %v278
    %v294 = vpack.c.b16 %v281, %v280
    %v295 = vpack.c.b16 %v283, %v282
    %v296 = vpack.c.b16 %v285, %v284
    %v297 = vpack.c.b16 %v287, %v286
    %v298 = vpack.c.b16 %v289, %v288
    %v299 = vpack.c.b16 %v291, %v290
    %308 = vmatpush.bf16.msra.mxu0 %v299
    %309 = vmatpush.bf16.msra.mxu0 %v298
    %310 = vmatpush.bf16.msra.mxu0 %v297
    %311 = vmatpush.bf16.msra.mxu0 %v296
    %312 = vmatpush.bf16.msra.mxu0 %v295
    %313 = vmatpush.bf16.msra.mxu0 %v294
    %314 = vmatpush.bf16.msra.mxu0 %v293
    %315 = vmatpush.bf16.msra.mxu0 %v292
    %316 = vmatmul.bf16.gmra.mxu0 %v234
    %v317 = vpop.f32.mrf.mxu0
    %v318 = vadd.f32 %v259, %v317
    %v319 = vpop.f32.mrf.mxu0
    %v320 = vadd.f32 %v259, %v319
    %321 = vmatmul.bf16.gmra.mxu0 %v235
    %v322 = vpop.f32.mrf.mxu0
    %v323 = vadd.f32 %v259, %v322
    %v324 = vpop.f32.mrf.mxu0
    %v325 = vadd.f32 %v259, %v324
    %326 = vmatmul.bf16.gmra.mxu0 %v236
    %v327 = vpop.f32.mrf.mxu0
    %v328 = vadd.f32 %v259, %v327
    %v329 = vpop.f32.mrf.mxu0
    %v330 = vadd.f32 %v259, %v329
    %331 = vmatmul.bf16.gmra.mxu0 %v237
    %v332 = vpop.f32.mrf.mxu0
    %v333 = vadd.f32 %v259, %v332
    %v334 = vpop.f32.mrf.mxu0
    %v335 = vadd.f32 %v259, %v334
    %336 = vmatmul.bf16.gmra.mxu0 %v238
    %v337 = vpop.f32.mrf.mxu0
    %v338 = vadd.f32 %v259, %v337
    %v339 = vpop.f32.mrf.mxu0
    %v340 = vadd.f32 %v259, %v339
    %341 = vmatmul.bf16.gmra.mxu0 %v239
    %v342 = vpop.f32.mrf.mxu0
    %v343 = vadd.f32 %v259, %v342
    %v344 = vpop.f32.mrf.mxu0
    %v345 = vadd.f32 %v259, %v344
    %346 = vmatmul.bf16.gmra.mxu0 %v240
    %v347 = vpop.f32.mrf.mxu0
    %v348 = vadd.f32 %v259, %v347
    %v349 = vpop.f32.mrf.mxu0
    %v350 = vadd.f32 %v259, %v349
    %351 = vmatmul.bf16.gmra.mxu0 %v241
    %v352 = vpop.f32.mrf.mxu0
    %v353 = vadd.f32 %v259, %v352
    %v354 = vpop.f32.mrf.mxu0
    %v355 = vadd.f32 %v259, %v354
    %356 = vdwg.mxu0
    %v357 = vmax.f32 %v318, 0.0
    %v358 = vmax.f32 %v320, 0.0
    %v359 = vmax.f32 %v323, 0.0
    %v360 = vmax.f32 %v325, 0.0
    %v361 = vmax.f32 %v328, 0.0
    %v362 = vmax.f32 %v330, 0.0
    %v363 = vmax.f32 %v333, 0.0
    %v364 = vmax.f32 %v335, 0.0
    %v365 = vmax.f32 %v338, 0.0
    %v366 = vmax.f32 %v340, 0.0
    %v367 = vmax.f32 %v343, 0.0
    %v368 = vmax.f32 %v345, 0.0
    %v369 = vmax.f32 %v348, 0.0
    %v370 = vmax.f32 %v350, 0.0
    %v371 = vmax.f32 %v353, 0.0
    %v372 = vmax.f32 %v355, 0.0
    %v373 = vpack.c.bf16 %v358, %v357
    %v374 = vpack.c.bf16 %v360, %v359
    %v375 = vpack.c.bf16 %v362, %v361
    %v376 = vpack.c.bf16 %v364, %v363
    %v377 = vpack.c.bf16 %v366, %v365
    %v378 = vpack.c.bf16 %v368, %v367
    %v379 = vpack.c.bf16 %v370, %v369
    %v380 = vpack.c.bf16 %v372, %v371
    %v381 = vld [vmem:[#allocation9] sm:$0xf]
    %v382 = vld [vmem:[#allocation9 + $0x4] sm:$0xf]
    %v383 = vld [vmem:[#allocation9 + $0x8] sm:$0xf]
    %v384 = vld [vmem:[#allocation9 + $0xc] sm:$0xf]
    %v385 = vld [vmem:[#allocation9 + $0x10] sm:$0xf]
    %v386 = vld [vmem:[#allocation9 + $0x14] sm:$0xf]
    %v387 = vld [vmem:[#allocation9 + $0x18] sm:$0xf]
    %v388 = vld [vmem:[#allocation9 + $0x1c] sm:$0xf]
    %v389 = vld [vmem:[#allocation9 + $0x20] sm:$0xf]
    %v390 = vld [vmem:[#allocation9 + $0x24] sm:$0xf]
    %v391 = vld [vmem:[#allocation9 + $0x28] sm:$0xf]
    %v392 = vld [vmem:[#allocation9 + $0x2c] sm:$0xf]
    %v393 = vld [vmem:[#allocation9 + $0x30] sm:$0xf]
    %v394 = vld [vmem:[#allocation9 + $0x34] sm:$0xf]
    %v395 = vld [vmem:[#allocation9 + $0x38] sm:$0xf]
    %v396 = vld [vmem:[#allocation9 + $0x3c] sm:$0xf]
    %v397 = vld [vmem:[%s5 + $0x2] sm:$0x1]
    %v398 = vperm.slane %v397, 0
    %v415 = vunpack.c.l.b16 %v381
    %v416 = vunpack.c.l.b16 %v382
    %v417 = vunpack.c.l.b16 %v383
    %v418 = vunpack.c.l.b16 %v384
    %v419 = vunpack.c.l.b16 %v385
    %v420 = vunpack.c.l.b16 %v386
    %v421 = vunpack.c.l.b16 %v387
    %v422 = vunpack.c.l.b16 %v388
    %v423 = vunpack.c.l.b16 %v389
    %v424 = vunpack.c.l.b16 %v390
    %v425 = vunpack.c.l.b16 %v391
    %v426 = vunpack.c.l.b16 %v392
    %v427 = vunpack.c.l.b16 %v393
    %v428 = vunpack.c.l.b16 %v394
    %v429 = vunpack.c.l.b16 %v395
    %v430 = vunpack.c.l.b16 %v396
    %v431 = vpack.c.b16 %v416, %v415
    %v432 = vpack.c.b16 %v418, %v417
    %v433 = vpack.c.b16 %v420, %v419
    %v434 = vpack.c.b16 %v422, %v421
    %v435 = vpack.c.b16 %v424, %v423
    %v436 = vpack.c.b16 %v426, %v425
    %v437 = vpack.c.b16 %v428, %v427
    %v438 = vpack.c.b16 %v430, %v429
    %447 = vmatpush.bf16.msra.mxu0 %v438
    %448 = vmatpush.bf16.msra.mxu0 %v437
    %449 = vmatpush.bf16.msra.mxu0 %v436
    %450 = vmatpush.bf16.msra.mxu0 %v435
    %451 = vmatpush.bf16.msra.mxu0 %v434
    %452 = vmatpush.bf16.msra.mxu0 %v433
    %453 = vmatpush.bf16.msra.mxu0 %v432
    %454 = vmatpush.bf16.msra.mxu0 %v431
    %455 = vmatmul.bf16.gmra.mxu0 %v373
    %v456 = vpop.f32.mrf.mxu0
    %v457 = vadd.f32 %v398, %v456
    %v458 = vpop.f32.mrf.mxu0
    %v459 = vadd.f32 %v398, %v458
    %460 = vmatmul.bf16.gmra.mxu0 %v374
    %v461 = vpop.f32.mrf.mxu0
    %v462 = vadd.f32 %v398, %v461
    %v463 = vpop.f32.mrf.mxu0
    %v464 = vadd.f32 %v398, %v463
    %465 = vmatmul.bf16.gmra.mxu0 %v375
    %v466 = vpop.f32.mrf.mxu0
    %v467 = vadd.f32 %v398, %v466
    %v468 = vpop.f32.mrf.mxu0
    %v469 = vadd.f32 %v398, %v468
    %470 = vmatmul.bf16.gmra.mxu0 %v376
    %v471 = vpop.f32.mrf.mxu0
    %v472 = vadd.f32 %v398, %v471
    %v473 = vpop.f32.mrf.mxu0
    %v474 = vadd.f32 %v398, %v473
    %475 = vmatmul.bf16.gmra.mxu0 %v377
    %v476 = vpop.f32.mrf.mxu0
    %v477 = vadd.f32 %v398, %v476
    %v478 = vpop.f32.mrf.mxu0
    %v479 = vadd.f32 %v398, %v478
    %480 = vmatmul.bf16.gmra.mxu0 %v378
    %v481 = vpop.f32.mrf.mxu0
    %v482 = vadd.f32 %v398, %v481
    %v483 = vpop.f32.mrf.mxu0
    %v484 = vadd.f32 %v398, %v483
    %485 = vmatmul.bf16.gmra.mxu0 %v379
    %v486 = vpop.f32.mrf.mxu0
    %v487 = vadd.f32 %v398, %v486
    %v488 = vpop.f32.mrf.mxu0
    %v489 = vadd.f32 %v398, %v488
    %490 = vmatmul.bf16.gmra.mxu0 %v380
    %v491 = vpop.f32.mrf.mxu0
    %v492 = vadd.f32 %v398, %v491
    %v493 = vpop.f32.mrf.mxu0
    %v494 = vadd.f32 %v398, %v493
    %495 = vdwg.mxu0
    %v496 = vmax.f32 %v457, 0.0
    %v497 = vmax.f32 %v459, 0.0
    %v498 = vmax.f32 %v462, 0.0
    %v499 = vmax.f32 %v464, 0.0
    %v500 = vmax.f32 %v467, 0.0
    %v501 = vmax.f32 %v469, 0.0
    %v502 = vmax.f32 %v472, 0.0
    %v503 = vmax.f32 %v474, 0.0
    %v504 = vmax.f32 %v477, 0.0
    %v505 = vmax.f32 %v479, 0.0
    %v506 = vmax.f32 %v482, 0.0
    %v507 = vmax.f32 %v484, 0.0
    %v508 = vmax.f32 %v487, 0.0
    %v509 = vmax.f32 %v489, 0.0
    %v510 = vmax.f32 %v492, 0.0
    %v511 = vmax.f32 %v494, 0.0
    %v512 = vpack.c.bf16 %v497, %v496
    %v513 = vpack.c.bf16 %v499, %v498
    %v514 = vpack.c.bf16 %v501, %v500
    %v515 = vpack.c.bf16 %v503, %v502
    %v516 = vpack.c.bf16 %v505, %v504
    %v517 = vpack.c.bf16 %v507, %v506
    %v518 = vpack.c.bf16 %v509, %v508
    %v519 = vpack.c.bf16 %v511, %v510
    %v520 = vld [vmem:[#allocation11] sm:$0xf]
    %v521 = vld [vmem:[#allocation11 + $0x4] sm:$0xf]
    %v522 = vld [vmem:[#allocation11 + $0x8] sm:$0xf]
    %v523 = vld [vmem:[#allocation11 + $0xc] sm:$0xf]
    %v524 = vld [vmem:[#allocation11 + $0x10] sm:$0xf]
    %v525 = vld [vmem:[#allocation11 + $0x14] sm:$0xf]
    %v526 = vld [vmem:[#allocation11 + $0x18] sm:$0xf]
    %v527 = vld [vmem:[#allocation11 + $0x1c] sm:$0xf]
    %v528 = vld [vmem:[#allocation11 + $0x20] sm:$0xf]
    %v529 = vld [vmem:[#allocation11 + $0x24] sm:$0xf]
    %v530 = vld [vmem:[#allocation11 + $0x28] sm:$0xf]
    %v531 = vld [vmem:[#allocation11 + $0x2c] sm:$0xf]
    %v532 = vld [vmem:[#allocation11 + $0x30] sm:$0xf]
    %v533 = vld [vmem:[#allocation11 + $0x34] sm:$0xf]
    %v534 = vld [vmem:[#allocation11 + $0x38] sm:$0xf]
    %v535 = vld [vmem:[#allocation11 + $0x3c] sm:$0xf]
    %v536 = vld [vmem:[%s5 + $0x3] sm:$0x1]
    %v537 = vperm.slane %v536, 0
    %v554 = vunpack.c.l.b16 %v520
    %v555 = vunpack.c.l.b16 %v521
    %v556 = vunpack.c.l.b16 %v522
    %v557 = vunpack.c.l.b16 %v523
    %v558 = vunpack.c.l.b16 %v524
    %v559 = vunpack.c.l.b16 %v525
    %v560 = vunpack.c.l.b16 %v526
    %v561 = vunpack.c.l.b16 %v527
    %v562 = vunpack.c.l.b16 %v528
    %v563 = vunpack.c.l.b16 %v529
    %v564 = vunpack.c.l.b16 %v530
    %v565 = vunpack.c.l.b16 %v531
    %v566 = vunpack.c.l.b16 %v532
    %v567 = vunpack.c.l.b16 %v533
    %v568 = vunpack.c.l.b16 %v534
    %v569 = vunpack.c.l.b16 %v535
    %v570 = vpack.c.b16 %v555, %v554
    %v571 = vpack.c.b16 %v557, %v556
    %v572 = vpack.c.b16 %v559, %v558
    %v573 = vpack.c.b16 %v561, %v560
    %v574 = vpack.c.b16 %v563, %v562
    %v575 = vpack.c.b16 %v565, %v564
    %v576 = vpack.c.b16 %v567, %v566
    %v577 = vpack.c.b16 %v569, %v568
    %586 = vmatpush.bf16.msra.mxu0 %v577
    %587 = vmatpush.bf16.msra.mxu0 %v576
    %588 = vmatpush.bf16.msra.mxu0 %v575
    %589 = vmatpush.bf16.msra.mxu0 %v574
    %590 = vmatpush.bf16.msra.mxu0 %v573
    %591 = vmatpush.bf16.msra.mxu0 %v572
    %592 = vmatpush.bf16.msra.mxu0 %v571
    %593 = vmatpush.bf16.msra.mxu0 %v570
    %594 = vmatmul.bf16.gmra.mxu0 %v512
    %v595 = vpop.f32.mrf.mxu0
    %v596 = vadd.f32 %v537, %v595
    %v597 = vpop.f32.mrf.mxu0
    %v598 = vadd.f32 %v537, %v597
    %599 = vmatmul.bf16.gmra.mxu0 %v513
    %v600 = vpop.f32.mrf.mxu0
    %v601 = vadd.f32 %v537, %v600
    %v602 = vpop.f32.mrf.mxu0
    %v603 = vadd.f32 %v537, %v602
    %604 = vmatmul.bf16.gmra.mxu0 %v514
    %v605 = vpop.f32.mrf.mxu0
    %v606 = vadd.f32 %v537, %v605
    %v607 = vpop.f32.mrf.mxu0
    %v608 = vadd.f32 %v537, %v607
    %609 = vmatmul.bf16.gmra.mxu0 %v515
    %v610 = vpop.f32.mrf.mxu0
    %v611 = vadd.f32 %v537, %v610
    %v612 = vpop.f32.mrf.mxu0
    %v613 = vadd.f32 %v537, %v612
    %614 = vmatmul.bf16.gmra.mxu0 %v516
    %v615 = vpop.f32.mrf.mxu0
    %v616 = vadd.f32 %v537, %v615
    %v617 = vpop.f32.mrf.mxu0
    %v618 = vadd.f32 %v537, %v617
    %619 = vmatmul.bf16.gmra.mxu0 %v517
    %v620 = vpop.f32.mrf.mxu0
    %v621 = vadd.f32 %v537, %v620
    %v622 = vpop.f32.mrf.mxu0
    %v623 = vadd.f32 %v537, %v622
    %624 = vmatmul.bf16.gmra.mxu0 %v518
    %v625 = vpop.f32.mrf.mxu0
    %v626 = vadd.f32 %v537, %v625
    %v627 = vpop.f32.mrf.mxu0
    %v628 = vadd.f32 %v537, %v627
    %629 = vmatmul.bf16.gmra.mxu0 %v519
    %v630 = vpop.f32.mrf.mxu0
    %v631 = vadd.f32 %v537, %v630
    %v632 = vpop.f32.mrf.mxu0
    %v633 = vadd.f32 %v537, %v632
    %634 = vdwg.mxu0
    %v635 = vmax.f32 %v596, 0.0
    %v636 = vmax.f32 %v598, 0.0
    %v637 = vmax.f32 %v601, 0.0
    %v638 = vmax.f32 %v603, 0.0
    %v639 = vmax.f32 %v606, 0.0
    %v640 = vmax.f32 %v608, 0.0
    %v641 = vmax.f32 %v611, 0.0
    %v642 = vmax.f32 %v613, 0.0
    %v643 = vmax.f32 %v616, 0.0
    %v644 = vmax.f32 %v618, 0.0
    %v645 = vmax.f32 %v621, 0.0
    %v646 = vmax.f32 %v623, 0.0
    %v647 = vmax.f32 %v626, 0.0
    %v648 = vmax.f32 %v628, 0.0
    %v649 = vmax.f32 %v631, 0.0
    %v650 = vmax.f32 %v633, 0.0
    %v651 = vpack.c.bf16 %v635, %v635
    %v652 = vpack.c.bf16 %v636, %v636
    %v653 = vpack.c.bf16 %v637, %v637
    %v654 = vpack.c.bf16 %v638, %v638
    %v655 = vpack.c.bf16 %v639, %v639
    %v656 = vpack.c.bf16 %v640, %v640
    %v657 = vpack.c.bf16 %v641, %v641
    %v658 = vpack.c.bf16 %v642, %v642
    %v659 = vpack.c.bf16 %v643, %v643
    %v660 = vpack.c.bf16 %v644, %v644
    %v661 = vpack.c.bf16 %v645, %v645
    %v662 = vpack.c.bf16 %v646, %v646
    %v663 = vpack.c.bf16 %v647, %v647
    %v664 = vpack.c.bf16 %v648, %v648
    %v665 = vpack.c.bf16 %v649, %v649
    %v666 = vpack.c.bf16 %v650, %v650
    %v667 = vld [vmem:[%s6] sm:$0x1]
    %v668 = vunpack.c.l.bf16 %v651
    %v669 = vunpack.c.l.bf16 %v652
    %v670 = vunpack.c.l.bf16 %v653
    %v671 = vunpack.c.l.bf16 %v654
    %v672 = vunpack.c.l.bf16 %v655
    %v673 = vunpack.c.l.bf16 %v656
    %v674 = vunpack.c.l.bf16 %v657
    %v675 = vunpack.c.l.bf16 %v658
    %v676 = vunpack.c.l.bf16 %v659
    %v677 = vunpack.c.l.bf16 %v660
    %v678 = vunpack.c.l.bf16 %v661
    %v679 = vunpack.c.l.bf16 %v662
    %v680 = vunpack.c.l.bf16 %v663
    %v681 = vunpack.c.l.bf16 %v664
    %v682 = vunpack.c.l.bf16 %v665
    %v683 = vunpack.c.l.bf16 %v666
    %v685 = vperm.slane %v667, 0
    %v687 = vmul.f32 %v668, %v685
    %v688 = vmul.f32 %v669, %v685
    %v689 = vmul.f32 %v670, %v685
    %v690 = vmul.f32 %v671, %v685
    %v691 = vmul.f32 %v672, %v685
    %v692 = vmul.f32 %v673, %v685
    %v693 = vmul.f32 %v674, %v685
    %v694 = vmul.f32 %v675, %v685
    %v695 = vmul.f32 %v676, %v685
    %v696 = vmul.f32 %v677, %v685
    %v697 = vmul.f32 %v678, %v685
    %v698 = vmul.f32 %v679, %v685
    %v699 = vmul.f32 %v680, %v685
    %v700 = vmul.f32 %v681, %v685
    %v701 = vmul.f32 %v682, %v685
    %v702 = vmul.f32 %v683, %v685
    %703 = vadd.xlane.f32.xlu0 %v687
    %v704 = vpop.xlane.xlu0 %703
    %705 = vadd.xlane.f32.xlu0 %v688
    %v706 = vpop.xlane.xlu0 %705
    %707 = vadd.xlane.f32.xlu0 %v689
    %v708 = vpop.xlane.xlu0 %707
    %709 = vadd.xlane.f32.xlu0 %v690
    %v710 = vpop.xlane.xlu0 %709
    %711 = vadd.xlane.f32.xlu0 %v691
    %v712 = vpop.xlane.xlu0 %711
    %713 = vadd.xlane.f32.xlu0 %v692
    %v714 = vpop.xlane.xlu0 %713
    %715 = vadd.xlane.f32.xlu0 %v693
    %v716 = vpop.xlane.xlu0 %715
    %717 = vadd.xlane.f32.xlu0 %v694
    %v718 = vpop.xlane.xlu0 %717
    %719 = vadd.xlane.f32.xlu0 %v695
    %v720 = vpop.xlane.xlu0 %719
    %721 = vadd.xlane.f32.xlu0 %v696
    %v722 = vpop.xlane.xlu0 %721
    %723 = vadd.xlane.f32.xlu0 %v697
    %v724 = vpop.xlane.xlu0 %723
    %725 = vadd.xlane.f32.xlu0 %v698
    %v726 = vpop.xlane.xlu0 %725
    %727 = vadd.xlane.f32.xlu0 %v699
    %v728 = vpop.xlane.xlu0 %727
    %729 = vadd.xlane.f32.xlu0 %v700
    %v730 = vpop.xlane.xlu0 %729
    %731 = vadd.xlane.f32.xlu0 %v701
    %v732 = vpop.xlane.xlu0 %731
    %733 = vadd.xlane.f32.xlu0 %v702
    %v734 = vpop.xlane.xlu0 %733
    %s735 = sld [smem:[#allocation2]]
    %v736 = vstv %s735
    %v737 = vadd.f32 %v704, %v736
    %v738 = vadd.f32 %v706, %v736
    %v739 = vadd.f32 %v708, %v736
    %v740 = vadd.f32 %v710, %v736
    %v741 = vadd.f32 %v712, %v736
    %v742 = vadd.f32 %v714, %v736
    %v743 = vadd.f32 %v716, %v736
    %v744 = vadd.f32 %v718, %v736
    %v745 = vadd.f32 %v720, %v736
    %v746 = vadd.f32 %v722, %v736
    %v747 = vadd.f32 %v724, %v736
    %v748 = vadd.f32 %v726, %v736
    %v749 = vadd.f32 %v728, %v736
    %v750 = vadd.f32 %v730, %v736
    %v751 = vadd.f32 %v732, %v736
    %v752 = vadd.f32 %v734, %v736
    %v753 = vand.u32 2147483647, %v737
    %v754 = vand.u32 2147483647, %v738
    %v755 = vand.u32 2147483647, %v739
    %v756 = vand.u32 2147483647, %v740
    %v757 = vand.u32 2147483647, %v741
    %v758 = vand.u32 2147483647, %v742
    %v759 = vand.u32 2147483647, %v743
    %v760 = vand.u32 2147483647, %v744
    %v761 = vand.u32 2147483647, %v745
    %v762 = vand.u32 2147483647, %v746
    %v763 = vand.u32 2147483647, %v747
    %v764 = vand.u32 2147483647, %v748
    %v765 = vand.u32 2147483647, %v749
    %v766 = vand.u32 2147483647, %v750
    %v767 = vand.u32 2147483647, %v751
    %v768 = vand.u32 2147483647, %v752
    %v785 = vlaneseq
    %v786 = vand.u32 %v785, 127
    %v787 = vperm.slane %v753, %v786
    %v788 = vadd.s32 %v786, 4294967288
    %v789 = vperm.slane %v754, %v788
    %vm790 = vcmask 130112
    %v791 = vsel %vm790, %v789, %v787
    %v792 = vadd.s32 %v786, 4294967280
    %v793 = vperm.slane %v755, %v792
    %vm794 = vcmask 195712
    %v795 = vsel %vm794, %v793, %v791
    %v796 = vadd.s32 %v786, 4294967272
    %v797 = vperm.slane %v756, %v796
    %vm798 = vcmask 261312
    %v799 = vsel %vm798, %v797, %v795
    %v800 = vadd.s32 %v786, 4294967264
    %v801 = vperm.slane %v757, %v800
    %vm802 = vcmask 326912
    %v803 = vsel %vm802, %v801, %v799
    %v804 = vadd.s32 %v786, 4294967256
    %v805 = vperm.slane %v758, %v804
    %vm806 = vcmask 392512
    %v807 = vsel %vm806, %v805, %v803
    %v808 = vadd.s32 %v786, 4294967248
    %v809 = vperm.slane %v759, %v808
    %vm810 = vcmask 458112
    %v811 = vsel %vm810, %v809, %v807
    %v812 = vadd.s32 %v786, 4294967240
    %v813 = vperm.slane %v760, %v812
    %vm814 = vcmask 523712
    %v815 = vsel %vm814, %v813, %v811
    %v816 = vadd.s32 %v786, 4294967232
    %v817 = vperm.slane %v761, %v816
    %vm818 = vcmask 589312
    %v819 = vsel %vm818, %v817, %v815
    %v820 = vadd.s32 %v786, 4294967224
    %v821 = vperm.slane %v762, %v820
    %vm822 = vcmask 654912
    %v823 = vsel %vm822, %v821, %v819
    %v824 = vadd.s32 %v786, 4294967216
    %v825 = vperm.slane %v763, %v824
    %vm826 = vcmask 720512
    %v827 = vsel %vm826, %v825, %v823
    %v828 = vadd.s32 %v786, 4294967208
    %v829 = vperm.slane %v764, %v828
    %vm830 = vcmask 786112
    %v831 = vsel %vm830, %v829, %v827
    %v832 = vadd.s32 %v786, 4294967200
    %v833 = vperm.slane %v765, %v832
    %vm834 = vcmask 851712
    %v835 = vsel %vm834, %v833, %v831
    %v836 = vadd.s32 %v786, 4294967192
    %v837 = vperm.slane %v766, %v836
    %vm838 = vcmask 917312
    %v839 = vsel %vm838, %v837, %v835
    %v840 = vadd.s32 %v786, 4294967184
    %v841 = vperm.slane %v767, %v840
    %vm842 = vcmask 982912
    %v843 = vsel %vm842, %v841, %v839
    %v844 = vadd.s32 %v786, 4294967176
    %v845 = vperm.slane %v768, %v844
    %vm846 = vcmask 1048512
    %v847 = vsel %vm846, %v845, %v843
    %849 = vst [vmem:[#allocation12] sm:$0x1] %v847
    // Predicated region
    $region54: #{tpu_custom_call.1} parent=1 // pred_check
      _
    $region55: #{tpu_custom_call.1} parent=1 // pred_check_branch
      %851 = sbr.rel (0) target = $region57
    $region56: #{tpu_custom_call.1} parent=1 // pred_region
      %853 = vsyncadd [#allocation5], 0
      %s855 = sshll.u32 [#allocation12], 4
      %s856 = int_to_ptr.vmem [resolvable:$true] %s855
      %s857 = sshll.u32 %s8, 4
      %s858 = int_to_ptr.hbm [resolvable:$true] %s857
      %860 = dma.vmem_to_hbm [thread:$0]  %s856, 16, %s858, [#allocation5]
    $region57: #{tpu_custom_call.1} parent=1 // pred_fallthru
      _
    // Predicated region
    $region58: #{tpu_custom_call.1} parent=1 // pred_check
      _
    $region59: #{tpu_custom_call.1} parent=1 // pred_check_branch
      %862 = sbr.rel (0) target = $region61
    $region60: #{tpu_custom_call.1} parent=1 // pred_region
      %864 = dma.done [#allocation5], 16
    $region61: #{tpu_custom_call.1} parent=1 // pred_fallthru
      _
    %865 = vsyncpa [#allocation4], 1
    %866 = vsyncpa [#allocation7], 1
    %867 = vsyncpa [#allocation10], 1
    %868 = vsyncpa [#allocation5], 1

</llo_original>
